<compile_context>
chip_gen: v7x
topology: tpu7x:2x2x1
jax: 0.10.0
libtpu: 0.0.40
codegen_flags: <defaults>
</compile_context>

<pallas_src>
import functools
import math

import jax
import jax.numpy as jnp
from jax.experimental import pallas as pl
from jax.experimental.pallas import tpu as pltpu


# ------------------------------- kernels ------------------------------------

def _rmsnorm_kernel(x_ref, w_ref, o_ref, *, eps):
    """Standard path: one full feature row (length D) per block row."""
    x = x_ref[...].astype(jnp.float32)                        # (tm, D)
    ms = jnp.mean(x * x, axis=-1, keepdims=True)              # XLU lane reduce
    inv = jax.lax.rsqrt(ms + eps)                             # EUP rsqrt
    w = w_ref[...].astype(jnp.float32)                        # (1, D) broadcast
    o_ref[...] = (x * inv * w).astype(o_ref.dtype)


def _rmsnorm_grouped_kernel(x_ref, mask_ref, w_ref, o_ref, *, eps, inv_d):
    """Lane-dense repacked path for D < 128.

    Each 128-lane row holds 128/D original feature rows.  mask is the
    (128, 128) block-diagonal group indicator, so (x*x) @ mask broadcasts every
    D-wide group's sum-of-squares back onto each lane of that group (MXU).
    """
    x = x_ref[...].astype(jnp.float32)                        # (tm, 128)
    grp = jnp.dot(x * x, mask_ref[...],
                  preferred_element_type=jnp.float32)         # per-group sums
    inv = jax.lax.rsqrt(grp * inv_d + eps)
    w = w_ref[...].astype(jnp.float32)                        # (1, 128) tiled
    o_ref[...] = (x * inv * w).astype(o_ref.dtype)


# ------------------------------- wrapper ------------------------------------

def rmsnorm(x, weight, *, eps=1e-5, target_block_bytes=2 << 20):
    """RMSNorm over the last axis of x.  weight: (d_model,)."""
    *lead, D = x.shape
    M = math.prod(lead) if lead else 1
    orig_shape = x.shape

    io_itemsize = jnp.dtype(x.dtype).itemsize
    sublane = {4: 8, 2: 16, 1: 32}.get(io_itemsize, 8)        # packed-tile rows

    # Per-generation VMEM ceiling (v5e/v6e 128 MiB phys, v7x 64 MiB per TC).
    try:
        phys_vmem = pltpu.get_tpu_info().vmem_capacity_bytes
    except Exception:
        phys_vmem = 64 << 20
    vmem_limit = int(min(48 << 20, phys_vmem * 3 // 4))

    # Narrow-D lane-dense repack: pack 128/D feature rows per vreg row.
    grouped = (D < 128) and (128 % D == 0) and ((M * D) % 128 == 0)
    if grouped:
        g = 128 // D
        Dk = 128
        Mr = (M * D) // 128
        x2 = x.reshape(Mr, Dk)                                # free: contiguous
        w_in = jnp.tile(weight.reshape(1, D), (1, g))         # (1, 128)
        row_grp = jax.lax.broadcasted_iota(jnp.int32, (Dk, Dk), 0) // D
        col_grp = jax.lax.broadcasted_iota(jnp.int32, (Dk, Dk), 1) // D
        mask = (row_grp == col_grp).astype(jnp.float32)       # block-diagonal
    else:
        Dk = D
        Mr = M
        x2 = x.reshape(Mr, Dk)
        w_in = weight.reshape(1, D)

    # Row tile: ~target_block_bytes per buffer in the real I/O dtype, rounded
    # to the sublane multiple; bounded so double-buffered in+out plus f32
    # intermediates stay comfortably inside vmem_limit.
    block_bytes = min(target_block_bytes, vmem_limit // 12)
    tm = max(sublane, block_bytes // (Dk * io_itemsize))
    tm -= tm % sublane
    # Keep >=2 grid steps when the row count allows it (v7x megacore).
    if Mr >= 2 * sublane:
        half = pl.cdiv(pl.cdiv(Mr, 2), sublane) * sublane
        tm = min(tm, half)
    if tm >= Mr:
        tm = Mr                                               # single full block
    tm = max(tm, 1)

    grid = (pl.cdiv(Mr, tm),)        # ragged last block: no pad / slice passes

    cparams = pltpu.CompilerParams(
        dimension_semantics=("parallel",),                    # megacore on v7x
        vmem_limit_bytes=vmem_limit)

    if grouped:
        out = pl.pallas_call(
            functools.partial(_rmsnorm_grouped_kernel, eps=eps, inv_d=1.0 / D),
            out_shape=jax.ShapeDtypeStruct((Mr, Dk), x.dtype),
            grid=grid,
            in_specs=[pl.BlockSpec((tm, Dk), lambda i: (i, 0)),   # activations
                      pl.BlockSpec((Dk, Dk), lambda i: (0, 0)),   # group mask
                      pl.BlockSpec((1, Dk), lambda i: (0, 0))],   # tiled weight
            out_specs=pl.BlockSpec((tm, Dk), lambda i: (i, 0)),
            compiler_params=cparams,
        )(x2, mask, w_in)
    else:
        out = pl.pallas_call(
            functools.partial(_rmsnorm_kernel, eps=eps),
            out_shape=jax.ShapeDtypeStruct((Mr, Dk), x.dtype),
            grid=grid,
            in_specs=[pl.BlockSpec((tm, Dk), lambda i: (i, 0)),   # activations
                      pl.BlockSpec((1, Dk), lambda i: (0, 0))],   # weight
            out_specs=pl.BlockSpec((tm, Dk), lambda i: (i, 0)),
            compiler_params=cparams,
        )(x2, w_in)

    return out.reshape(orig_shape)


# -------------------------------- demo --------------------------------------

if __name__ == "__main__":
    key = jax.random.PRNGKey(0)
    k1, k2, k3 = jax.random.split(key, 3)
    eps = 1e-5

    def ref_rmsnorm(x, w):
        return x * jax.lax.rsqrt(jnp.mean(x * x, axis=-1, keepdims=True) + eps) * w

    # 1) Lane-dense D (multiple of 128); small forced tile -> multi-step grid
    #    with a ragged last row-block (M = 50 rows).
    B, L, D = 2, 25, 128
    x = jax.random.normal(k1, (B, L, D), jnp.float32)
    w = 1.0 + 0.1 * jax.random.normal(k2, (D,), jnp.float32)
    out = jax.block_until_ready(rmsnorm(x, w, eps=eps, target_block_bytes=8 * 1024))
    assert out.shape == x.shape
    assert bool(jnp.all(jnp.isfinite(out)))
    assert jnp.allclose(out, ref_rmsnorm(x, w), atol=1e-5, rtol=1e-5)

    # 1b) Same inputs through the default tiling (exercises the >=2-step cap).
    out_d = jax.block_until_ready(rmsnorm(x, w, eps=eps))
    assert jnp.allclose(out_d, ref_rmsnorm(x, w), atol=1e-5, rtol=1e-5)

    # 2) Narrow feature dim (d_model = 32): lane-dense repacked (grouped) path,
    #    torch default init weight = ones.
    B2, L2, D2 = 2, 8, 32
    x_s = jax.random.normal(k3, (B2, L2, D2), jnp.float32)
    w_s = jnp.ones((D2,), jnp.float32)
    out_s = jax.block_until_ready(rmsnorm(x_s, w_s, eps=eps))
    assert out_s.shape == x_s.shape
    assert jnp.allclose(out_s, ref_rmsnorm(x_s, w_s), atol=1e-5, rtol=1e-5)

    print("KERNEL_OK")
</pallas_src>

<mosaic_0001>
module attributes {stable_mosaic.version = 11 : i64} {
  func.func @_rmsnorm_kernel(%arg0: i32, %arg1: memref<16x128xf32, #tpu.memory_space<vmem>>, %arg2: memref<1x128xf32, #tpu.memory_space<vmem>>, %arg3: memref<16x128xf32, #tpu.memory_space<vmem>>) attributes {dimension_semantics = [#tpu.dimension_semantics<parallel>], iteration_bounds = array<i64: 4>, scalar_prefetch = 0 : i64, scratch_operands = 0 : i64, tpu.core_type = #tpu.core_type<tc>, window_params = [{transform_indices = @transform_0, window_bounds = array<i64: 16, 128>}, {pipeline_mode = #tpu.pipeline_mode<synchronous>, transform_indices = @transform_1, window_bounds = array<i64: 1, 128>}, {transform_indices = @transform_2, window_bounds = array<i64: 16, 128>}]} {
    %c0 = arith.constant 0 : index
    %c0_0 = arith.constant 0 : index
    %0 = vector.load %arg1[%c0, %c0_0] : memref<16x128xf32, #tpu.memory_space<vmem>>, vector<16x128xf32>
    %1 = arith.mulf %0, %0 : vector<16x128xf32>
    %cst = arith.constant dense<0.000000e+00> : vector<16xf32>
    %2 = vector.multi_reduction <add>, %1, %cst [1] : vector<16x128xf32> to vector<16xf32>
    %3 = vector.shape_cast %2 : vector<16xf32> to vector<16x1xf32>
    %cst_1 = arith.constant 1.280000e+02 : f32
    %4 = vector.broadcast %cst_1 : f32 to vector<16x1xf32>
    %5 = arith.divf %3, %4 : vector<16x1xf32>
    %cst_2 = arith.constant 9.99999974E-6 : f32
    %6 = vector.broadcast %cst_2 : f32 to vector<16x1xf32>
    %7 = arith.addf %5, %6 : vector<16x1xf32>
    %8 = math.rsqrt %7 : vector<16x1xf32>
    %c0_3 = arith.constant 0 : index
    %c0_4 = arith.constant 0 : index
    %9 = vector.load %arg2[%c0_3, %c0_4] : memref<1x128xf32, #tpu.memory_space<vmem>>, vector<1x128xf32>
    %10 = vector.broadcast %8 : vector<16x1xf32> to vector<16x128xf32>
    %11 = arith.mulf %0, %10 : vector<16x128xf32>
    %12 = vector.broadcast %9 : vector<1x128xf32> to vector<16x128xf32>
    %13 = arith.mulf %11, %12 : vector<16x128xf32>
    %c0_5 = arith.constant 0 : index
    %c0_6 = arith.constant 0 : index
    %14 = vector.load %arg3[%c0_5, %c0_6] : memref<16x128xf32, #tpu.memory_space<vmem>>, vector<16x128xf32>
    tpu.vector_store %arg3[%c0_5, %c0_6], %13 {strides = array<i32>} : memref<16x128xf32, #tpu.memory_space<vmem>>, vector<16x128xf32>,
    return
  }
  func.func @transform_0(%arg0: i32) -> (i32, i32) {
    %c0_i32 = arith.constant 0 : i32
    %c0_i32_0 = arith.constant 0 : i32
    return %arg0, %c0_i32 : i32, i32
  }
  func.func @transform_1(%arg0: i32) -> (i32, i32) {
    %c0_i32 = arith.constant 0 : i32
    %c0_i32_0 = arith.constant 0 : i32
    %c0_i32_1 = arith.constant 0 : i32
    return %c0_i32, %c0_i32_0 : i32, i32
  }
  func.func @transform_2(%arg0: i32) -> (i32, i32) {
    %c0_i32 = arith.constant 0 : i32
    %c0_i32_0 = arith.constant 0 : i32
    return %arg0, %c0_i32 : i32, i32
  }
}

</mosaic_0001>

<llo_original>
// kernel: tpu_custom_call.1
$region0: #{tpu_custom_call.1}
  #allocation0 [shape = 'u32[]', space=smem, size = 0x4, offset = 0x4, fixed_abs, tag = 'smem constant byte address 0x4 - core index']
  #allocation1 [shape = 'u32[144,128]{1,0:T(1,128)}', space=vmem, size = 0x12000, scoped, tag = 'internal scratch']
  %s0 = inlined_call_operand.hbm [shape: f32[50,128], index: 0, kind: input, shape index: {}]
  %s1 = inlined_call_operand.vmem [shape: f32[1,128], index: 1, kind: input, shape index: {}]
  %s2 = inlined_call_operand.hbm [shape: f32[50,128], index: 2, kind: output, shape index: {}]
  %s3 = sld [smem:[#allocation0]]
  $region45: #{tpu_custom_call.1} parent=0
    _
  %s5 = ssub.s32 1, %s3
  %s6 = scalar_select 0, %s5, %s3
  $region1: #{tpu_custom_call.1} parent=0
    #allocation2 [shape = 'u8[16384]{0}', space=vmem, size = 0x4000, scoped, tag = 'input window, operand 0']
    #allocation3 [shape = 's32[2]{0}', space=sflag, size = 0x8, scoped, tag = 'scoped memory for tpu_custom_call.1']
    #allocation4 [shape = 's32[2]{0}', space=sflag, size = 0x8, scoped, tag = 'scoped memory for tpu_custom_call.1']
    #allocation5 [shape = 'u8[16384]{0}', space=vmem, size = 0x4000, scoped, tag = 'output window, operand 0']
    %7 = vsyncpa [#allocation3], 0
    %s8 = scalar_lea.sflag [#allocation3], 1
    %9 = vsyncpa %s8, 0
    %10 = vsyncpa [#allocation4], 0
    %s11 = scalar_lea.sflag [#allocation4], 1
    %12 = vsyncpa %s11, 0
    loop: start=0, step=1, limit=6
    $region2: #{tpu_custom_call.1} parent=1 // loop_pre_header
      _
    $region3: #{tpu_custom_call.1} parent=1 // loop_header
      %s14 = sphi 0, %s18
      %p15 = scmp.ge.s32.totalorder %s14, 6
      %s24 = sphi 0, %s26
      %s27 = sphi 0, %s24
      %s28 = sphi 0, %s27
      %s44 = sphi 0, %s28
      %s48 = sphi 0, %s48
      %s50 = sphi 0, %s48
      %s51 = sphi 0, %s50
      %s65 = sphi 0, %s51
      %s71 = sphi 0, %s73
      %s74 = sphi 0, %s71
      %s75 = sphi 0, %s74
      %s91 = sphi 0, %s75
    $region4: #{tpu_custom_call.1} parent=1 // loop_header_branch
      %17 = sbr.rel (%p15) target = $region8
    $region5: #{tpu_custom_call.1} parent=1 // loop_body
      %s19 = ssub.s32 %s14, 1
      %s20 = ssub.s32 %s14, 2
      %s21 = sadd.s32 %s14, 1
      %s22 = ssub.s32 %s14, %s21
      %p23 = scmp.eq.s32.totalorder %s22, 0
      %s25 = sadd.s32 %s24, 1
      %s26 = scalar_select %p23, %s24, %s25
      %p29 = pneg %p23
      %p30 = scmp.eq.s32.totalorder %s14, 3
      %p31 = por %p29, %p30
      %p32 = scmp.ne.s32.totalorder %s24, %s27
      %p33 = scmp.eq.s32.totalorder %s14, 0
      %p34 = por %p32, %p33
      %p35 = scmp.ne.s32.totalorder %s24, %s27
      %p36 = scmp.eq.s32.totalorder %s19, 3
      %p37 = por %p35, %p36
      %p38 = scmp.ne.s32.totalorder %s27, %s28
      %p39 = scmp.eq.s32.totalorder %s19, 0
      %p40 = por %p38, %p39
      %p41 = scmp.ne.s32.totalorder %s27, %s28
      %p42 = scmp.eq.s32.totalorder %s20, 3
      %p43 = por %p41, %p42
      %p45 = scmp.ne.s32.totalorder %s28, %s44
      %p46 = scmp.eq.s32.totalorder %s20, 0
      %p47 = por %p45, %p46
      %s49 = sadd.s32 %s48, 1
      %p52 = scmp.eq.s32.totalorder %s14, 3
      %p53 = scmp.ne.s32.totalorder %s48, %s50
      %p54 = scmp.eq.s32.totalorder %s14, 0
      %p55 = por %p53, %p54
      %p56 = scmp.ne.s32.totalorder %s48, %s50
      %p57 = scmp.eq.s32.totalorder %s19, 3
      %p58 = por %p56, %p57
      %p59 = scmp.ne.s32.totalorder %s50, %s51
      %p60 = scmp.eq.s32.totalorder %s19, 0
      %p61 = por %p59, %p60
      %p62 = scmp.ne.s32.totalorder %s50, %s51
      %p63 = scmp.eq.s32.totalorder %s20, 3
      %p64 = por %p62, %p63
      %p66 = scmp.ne.s32.totalorder %s51, %s65
      %p67 = scmp.eq.s32.totalorder %s20, 0
      %p68 = por %p66, %p67
      %s69 = ssub.s32 %s14, %s21
      %p70 = scmp.eq.s32.totalorder %s69, 0
      %s72 = sadd.s32 %s71, 1
      %s73 = scalar_select %p70, %s71, %s72
      %p76 = pneg %p70
      %p77 = scmp.eq.s32.totalorder %s14, 3
      %p78 = por %p76, %p77
      %p79 = scmp.ne.s32.totalorder %s71, %s74
      %p80 = scmp.eq.s32.totalorder %s14, 0
      %p81 = por %p79, %p80
      %p82 = scmp.ne.s32.totalorder %s71, %s74
      %p83 = scmp.eq.s32.totalorder %s19, 3
      %p84 = por %p82, %p83
      %p85 = scmp.ne.s32.totalorder %s74, %s75
      %p86 = scmp.eq.s32.totalorder %s19, 0
      %p87 = por %p85, %p86
      %p88 = scmp.ne.s32.totalorder %s74, %s75
      %p89 = scmp.eq.s32.totalorder %s20, 3
      %p90 = por %p88, %p89
      %p92 = scmp.ne.s32.totalorder %s75, %s91
      %p93 = scmp.eq.s32.totalorder %s20, 0
      %p94 = por %p92, %p93
      %p95 = scmp.le.s32.totalorder 1, %s14
      %p96 = scmp.lt.s32.totalorder %s14, 5
      %p97 = pnand %p95, %p96
      %p98 = pneg %p97
      // Predicated region
      $region9: #{tpu_custom_call.1} parent=5 // pred_check
        _
      $region10: #{tpu_custom_call.1} parent=5 // pred_check_branch
        %100 = sbr.rel (%p97) target = $region12
      $region11: #{tpu_custom_call.1} parent=5 // pred_region
        %s101 = ssub.s32 %s14, 1
        // Predicated region
        $region13: #{tpu_custom_call.1} parent=11 // pred_check
          %p102 = pneg %p61
        $region14: #{tpu_custom_call.1} parent=11 // pred_check_branch
          %104 = sbr.rel (%p102) target = $region16
        $region15: #{tpu_custom_call.1} parent=11 // pred_region
          _
        $region16: #{tpu_custom_call.1} parent=11 // pred_fallthru
          _
      $region12: #{tpu_custom_call.1} parent=5 // pred_fallthru
        _
      %p105 = scmp.lt.s32.totalorder %s14, 4
      // Predicated region
      $region17: #{tpu_custom_call.1} parent=5 // pred_check
        %p106 = pneg %p105
      $region18: #{tpu_custom_call.1} parent=5 // pred_check_branch
        %108 = sbr.rel (%p106) target = $region20
      $region19: #{tpu_custom_call.1} parent=5 // pred_region
        // Predicated region
        $region21: #{tpu_custom_call.1} parent=19 // pred_check
          %p109 = pneg %p34
        $region22: #{tpu_custom_call.1} parent=19 // pred_check_branch
          %111 = sbr.rel (%p109) target = $region24
        $region23: #{tpu_custom_call.1} parent=19 // pred_region
          %s112 = sand.u32 %s24, 1
          %s113 = scalar_lea.sflag [#allocation3], %s112
          %s114 = sand.u32 %s24, 1
          %s115 = smul.addr %s114, 16
          %s116 = scalar_lea.vmem [#allocation2], %s115
          %s117 = smul.u32 2, %s14
          %s118 = ssub.s32 7, %s117
          %p119 = scmp.lt.s32.totalorder %s118, 2
          %s120 = scalar_select %p119, %s118, 2
          %s121 = smul.u32 128, %s120
          %s123 = ssub.s32 256, %s121
          %124 = vsyncadd %s113, %s123
          %p125 = scmp.ne.s32.totalorder 0, %s121
          %s126 = smul.addr %s117, 128
          %s127 = scalar_lea.hbm %s0, %s126
          %s128 = smul.u32 8, %s120
          %s129 = sshll.u32 %s116, 4
          %s130 = int_to_ptr.vmem [resolvable:$true] %s129
          %s131 = sshll.u32 %s128, 4
          %135 = dma.hbm_to_vmem [thread:$0]  (%p125), %s127, %s131, %s130, %s113, 128, 128, 8
        $region24: #{tpu_custom_call.1} parent=19 // pred_fallthru
          _
      $region20: #{tpu_custom_call.1} parent=5 // pred_fallthru
        _
      %p136 = scmp.le.s32.totalorder 1, %s14
      %p137 = scmp.lt.s32.totalorder %s14, 5
      %p138 = pnand %p136, %p137
      %p139 = pneg %p138
      // Predicated region
      $region25: #{tpu_custom_call.1} parent=5 // pred_check
        _
      $region26: #{tpu_custom_call.1} parent=5 // pred_check_branch
        %141 = sbr.rel (%p138) target = $region28
      $region27: #{tpu_custom_call.1} parent=5 // pred_region
        %s142 = ssub.s32 %s14, 1
        %s143 = sand.u32 %s27, 1
        %s144 = scalar_lea.sflag [#allocation3], %s143
        %s145 = sand.u32 %s27, 1
        %s146 = smul.addr %s145, 16
        %s147 = scalar_lea.vmem [#allocation2], %s146
        // Predicated region
        $region29: #{tpu_custom_call.1} parent=27 // pred_check
          %p148 = pneg %p40
        $region30: #{tpu_custom_call.1} parent=27 // pred_check_branch
          %150 = sbr.rel (%p148) target = $region32
        $region31: #{tpu_custom_call.1} parent=27 // pred_region
          %151 = dma.done %s144, 256
        $region32: #{tpu_custom_call.1} parent=27 // pred_fallthru
          _
        %s152 = sand.u32 %s27, 1
        %s153 = scalar_lea.sflag [#allocation3], %s152
        %s154 = sand.u32 %s27, 1
        %s155 = smul.addr %s154, 16
        %s156 = scalar_lea.vmem [#allocation2], %s155
        %p157 = pneg %p40
        %p158 = pneg %p37
        %p159 = pneg %p61
        %p160 = pneg %p58
        %p161 = pneg %p87
        %p162 = pneg %p84
        %s163 = sand.u32 %s74, 1
        %s164 = scalar_lea.sflag [#allocation4], %s163
        %s165 = sand.u32 %s74, 1
        %s166 = smul.addr %s165, 16
        %s167 = scalar_lea.vmem [#allocation5], %s166
        %s168 = smul.u32 2, %s19
        %s169 = ssub.s32 7, %s168
        %p170 = scmp.lt.s32.totalorder %s169, 2
        %s171 = scalar_select %p170, %s169, 2
        %s172 = smul.u32 128, %s171
        %s173 = smul.u32 2, %s19
        %s174 = ssub.s32 7, %s173
        %p175 = scmp.lt.s32.totalorder %s174, 2
        %s176 = scalar_select %p175, %s174, 2
        %s177 = smul.u32 128, %s176
        %v178 = vld [vmem:[%s147] sm:$0xff]
        %v179 = vld [vmem:[%s147 + $0x8] sm:$0xff]
        %v180 = vmul.f32 %v178, %v178
        %v181 = vmul.f32 %v179, %v179
        %182 = vadd.xlane.f32.xlu0 %v180
        %v183 = vpop.xlane.xlu0 %182
        %184 = vadd.xlane.f32.xlu0 %v181
        %v185 = vpop.xlane.xlu0 %184
        %v186 = vrcp.pop 128.0
        %v187 = vmul.f32 %v183, %v186
        %v188 = vmul.f32 %v185, %v186
        %v189 = vadd.f32 %v187, 1e-05
        %v190 = vadd.f32 %v188, 1e-05
        %v191 = vrsqrt.pop %v189
        %v192 = vrsqrt.pop %v190
        %v193 = vld [vmem:[%s1] sm:$0x1]
        %v194 = vmul.f32 %v178, %v191
        %v195 = vmul.f32 %v179, %v192
        %v197 = vlaneseq
        %v198 = vshrl.u32 %v197, 7
        %v199 = vsub.s32 0, %v198
        %v200 = vrot.slane %v193, %v199
        %v202 = vmul.f32 %v194, %v200
        %v203 = vmul.f32 %v195, %v200
        %204 = vst [vmem:[%s167] sm:$0xff] %v202
        %205 = vst [vmem:[%s167 + $0x8] sm:$0xff] %v203
        %s206 = sand.u32 %s74, 1
        %s207 = scalar_lea.sflag [#allocation4], %s206
        %s208 = sand.u32 %s74, 1
        %s209 = smul.addr %s208, 16
        %s210 = scalar_lea.vmem [#allocation5], %s209
        // Predicated region
        $region33: #{tpu_custom_call.1} parent=27 // pred_check
          %p211 = pneg %p84
        $region34: #{tpu_custom_call.1} parent=27 // pred_check_branch
          %213 = sbr.rel (%p211) target = $region36
        $region35: #{tpu_custom_call.1} parent=27 // pred_region
          %s214 = smul.u32 2, %s19
          %s215 = ssub.s32 7, %s214
          %p216 = scmp.lt.s32.totalorder %s215, 2
          %s217 = scalar_select %p216, %s215, 2
          %s218 = smul.u32 128, %s217
          %s220 = ssub.s32 256, %s218
          %221 = vsyncadd %s207, %s220
          %p222 = scmp.ne.s32.totalorder 0, %s218
          %s223 = smul.addr %s214, 128
          %s224 = scalar_lea.hbm %s2, %s223
          %s225 = smul.u32 8, %s217
          %s226 = sshll.u32 %s210, 4
          %s227 = int_to_ptr.vmem [resolvable:$true] %s226
          %s228 = sshll.u32 %s225, 4
          %232 = dma.vmem_to_hbm [thread:$0]  (%p222), %s227, %s228, %s224, %s207, 128, 128, 8
        $region36: #{tpu_custom_call.1} parent=27 // pred_fallthru
          _
      $region28: #{tpu_custom_call.1} parent=5 // pred_fallthru
        _
      %p233 = scmp.le.s32.totalorder 2, %s14
      // Predicated region
      $region37: #{tpu_custom_call.1} parent=5 // pred_check
        %p234 = pneg %p233
      $region38: #{tpu_custom_call.1} parent=5 // pred_check_branch
        %236 = sbr.rel (%p234) target = $region40
      $region39: #{tpu_custom_call.1} parent=5 // pred_region
        %s237 = ssub.s32 %s14, 2
        // Predicated region
        $region41: #{tpu_custom_call.1} parent=39 // pred_check
          %p238 = pneg %p90
        $region42: #{tpu_custom_call.1} parent=39 // pred_check_branch
          %240 = sbr.rel (%p238) target = $region44
        $region43: #{tpu_custom_call.1} parent=39 // pred_region
          %s241 = sand.u32 %s75, 1
          %s242 = scalar_lea.sflag [#allocation4], %s241
          %s243 = sand.u32 %s75, 1
          %s244 = smul.addr %s243, 16
          %s245 = scalar_lea.vmem [#allocation5], %s244
          %246 = dma.done %s242, 256
        $region44: #{tpu_custom_call.1} parent=39 // pred_fallthru
          _
      $region40: #{tpu_custom_call.1} parent=5 // pred_fallthru
        _
    $region6: #{tpu_custom_call.1} parent=1 // loop_footer
      %s18 = sadd.s32 1, %s14
    $region7: #{tpu_custom_call.1} parent=1 // loop_footer_branch
      %13 = sbr.rel target = $region3
    $region8: #{tpu_custom_call.1} parent=1 // loop_exit
      _
    %247 = vsyncpa [#allocation3], 1
    %s248 = scalar_lea.sflag [#allocation3], 1
    %249 = vsyncpa %s248, 1
    %250 = vsyncpa [#allocation4], 1
    %s251 = scalar_lea.sflag [#allocation4], 1
    %252 = vsyncpa %s251, 1

</llo_original>
